<compile_context>
chip_gen: v7x
topology: tpu7x:2x2x1
jax: 0.10.0
libtpu: 0.0.40
codegen_flags: <defaults>
</compile_context>

<pallas_src>
import functools

import jax
import jax.numpy as jnp
from jax import lax
from jax.experimental import pallas as pl
from jax.experimental.pallas import tpu as pltpu

_INV_SQRT2 = 0.7071067811865476  # 1/sqrt(2), hoisted Python constant


def _mlp_kernel(x_ref, w1_ref, b1_ref, w2_ref, b2_ref, o_ref, *, approx_gelu):
    # x_ref:  (tm, D_in)   f32 tile of input rows (cast to bf16 in-kernel)
    # w1_ref: (D_in, H)    bf16 fc1 weight (pre-transposed, resident, 1-buffered)
    # b1_ref: (1, H)       f32 fc1 bias
    # w2_ref: (H, D_out)   bf16 fc2 weight (pre-transposed, resident, 1-buffered)
    # b2_ref: (1, D_out)   f32 fc2 bias
    # o_ref:  (tm, D_out)  f32 output tile
    x = x_ref[...].astype(w1_ref.dtype)  # one cheap VALU cast per (small) x tile
    # fc1: bf16 x bf16 -> f32 accumulate on the MXU, bias added in f32.
    h = jnp.dot(x, w1_ref[...], preferred_element_type=jnp.float32) + b1_ref[...]
    if approx_gelu:
        # tanh-approx GELU -> EUP transcendental slot (v6e/v7x perf path).
        h = jax.nn.gelu(h, approximate=True)
    else:
        # Exact (erf-based) GELU in f32, matching PyTorch's default nn.GELU().
        h = 0.5 * h * (1.0 + lax.erf(h * _INV_SQRT2))
    # fc2: cast activations back to bf16 for the MXU, f32 accumulate.
    o = (
        jnp.dot(h.astype(w2_ref.dtype), w2_ref[...], preferred_element_type=jnp.float32)
        + b2_ref[...]
    )
    # Dropout with p=0.0 (module default / eval mode) is the identity.
    o_ref[...] = o.astype(o_ref.dtype)


def _round_up(x, m):
    return ((x + m - 1) // m) * m


def _vmem_capacity_bytes():
    """Physical VMEM of the current chip; conservative fallback (v7x per-TC)."""
    try:
        cap = getattr(pltpu.get_tpu_info(), "vmem_capacity_bytes", None)
        if cap:
            return int(cap)
    except Exception:
        pass
    return 64 * 1024 * 1024


def _choose_row_tiling(m, tile_m):
    """Row tile + tile count: bounded padding waste, >=2 steps when possible."""
    # Enough tiles to cover m with tile_m, but at least min(4, cdiv(m, 8)) so
    # megacore sharding and DMA/compute overlap have work to split.
    n_tiles = max(pl.cdiv(m, tile_m), min(4, pl.cdiv(m, 8)))
    tile = _round_up(pl.cdiv(m, n_tiles), 8)       # sublane-aligned
    n_tiles = pl.cdiv(m, tile)                     # re-derive after rounding
    return tile, n_tiles


def prepare_mlp_params(w1, b1, w2, b2):
    """Pad to lane-dense (multiple-of-128) feature dims and cast weights to
    bf16 ONCE at init; zero padding is mathematically inert (GELU(0)=0 and the
    padded W2 rows are 0)."""
    in_feat, hid_feat = w1.shape
    out_feat = w2.shape[1]
    in_pad = _round_up(in_feat, 128)
    hid_pad = _round_up(hid_feat, 128)
    out_pad = _round_up(out_feat, 128)

    w1_p = jnp.pad(w1, ((0, in_pad - in_feat), (0, hid_pad - hid_feat))).astype(jnp.bfloat16)
    w2_p = jnp.pad(w2, ((0, hid_pad - hid_feat), (0, out_pad - out_feat))).astype(jnp.bfloat16)
    b1_p = jnp.pad(b1, (0, hid_pad - hid_feat)).reshape(1, hid_pad).astype(jnp.float32)
    b2_p = jnp.pad(b2, (0, out_pad - out_feat)).reshape(1, out_pad).astype(jnp.float32)
    return w1_p, b1_p, w2_p, b2_p


@functools.partial(jax.jit, static_argnames=("out_feat", "tile_m", "approx_gelu"))
def mlp_pallas(x, w1_p, b1_p, w2_p, b2_p, *, out_feat, tile_m=512, approx_gelu=False):
    """x: (..., in_feat) f32; pre-padded bf16 weights -> (..., out_feat) f32."""
    orig_shape = x.shape
    in_feat = x.shape[-1]
    in_pad, hid_pad = w1_p.shape
    out_pad = w2_p.shape[1]

    x2 = x.reshape(-1, in_feat)
    m = x2.shape[0]

    tile_m_eff, n_tiles = _choose_row_tiling(m, tile_m)
    m_pad = n_tiles * tile_m_eff

    # Pad rows/features of x only if needed; x keeps its dtype (no wrapper-side
    # bf16 copy -> kernel casts each tile in registers instead).
    pad_rows, pad_cols = m_pad - m, in_pad - in_feat
    if pad_rows or pad_cols:
        x2 = jnp.pad(x2, ((0, pad_rows), (0, pad_cols)))

    x_bytes = jnp.dtype(x.dtype).itemsize

    # Tight VMEM budget:
    #   weights/biases single-buffered, x/out tiles double-buffered (pipeline),
    #   plus in-kernel temporaries (bf16 x copy, f32 h + ~2x GELU temps,
    #   bf16 h copy, f32 o).  25% margin, floored at the default 32 MiB and
    #   capped at 85% of physical VMEM (v7x has only 64 MiB per TensorCore).
    weight_bytes = (in_pad * hid_pad + hid_pad * out_pad) * 2 + (hid_pad + out_pad) * 4
    tile_io_bytes = 2 * tile_m_eff * in_pad * x_bytes + 2 * tile_m_eff * out_pad * 4
    temp_bytes = (
        tile_m_eff * in_pad * 2
        + 3 * tile_m_eff * hid_pad * 4
        + tile_m_eff * hid_pad * 2
        + tile_m_eff * out_pad * 4
    )
    est_bytes = weight_bytes + tile_io_bytes + temp_bytes
    vmem_limit = int(
        min(max(int(1.25 * est_bytes), 32 * 1024 * 1024),
            int(0.85 * _vmem_capacity_bytes()))
    )

    kernel = functools.partial(_mlp_kernel, approx_gelu=approx_gelu)
    resident = pl.Buffered(1)  # constant index map -> no benefit from 2 buffers

    out = pl.pallas_call(
        kernel,
        out_shape=jax.ShapeDtypeStruct((m_pad, out_pad), x.dtype),
        grid_spec=pltpu.PrefetchScalarGridSpec(
            num_scalar_prefetch=0,
            grid=(n_tiles,),
            in_specs=[
                pl.BlockSpec((tile_m_eff, in_pad), lambda i: (i, 0)),  # x row tile
                pl.BlockSpec((in_pad, hid_pad), lambda i: (0, 0),
                             pipeline_mode=resident),                  # W1 (resident)
                pl.BlockSpec((1, hid_pad), lambda i: (0, 0),
                             pipeline_mode=resident),                  # b1
                pl.BlockSpec((hid_pad, out_pad), lambda i: (0, 0),
                             pipeline_mode=resident),                  # W2 (resident)
                pl.BlockSpec((1, out_pad), lambda i: (0, 0),
                             pipeline_mode=resident),                  # b2
            ],
            out_specs=pl.BlockSpec((tile_m_eff, out_pad), lambda i: (i, 0)),
        ),
        compiler_params=pltpu.CompilerParams(
            dimension_semantics=("parallel",),
            vmem_limit_bytes=vmem_limit,
        ),
    )(x2, w1_p, b1_p, w2_p, b2_p)

    # Strip row/feature padding and restore leading dims.
    return out[:m, :out_feat].reshape(orig_shape[:-1] + (out_feat,))


def mlp_reference(x, w1, b1, w2, b2):
    h = x @ w1 + b1
    h = 0.5 * h * (1.0 + lax.erf(h / jnp.sqrt(2.0)))
    return h @ w2 + b2


if __name__ == "__main__":
    # Small shapes consistent with the module (tokens of dim in_feat).
    B, S = 2, 8
    in_feat, hid_feat, out_feat = 32, 64, 32

    key = jax.random.PRNGKey(0)
    kx, kw1, kb1, kw2, kb2 = jax.random.split(key, 5)

    x = jax.random.normal(kx, (B, S, in_feat), dtype=jnp.float32)
    # Parameters stored pre-transposed: (in, out) instead of PyTorch's (out, in).
    w1 = jax.random.normal(kw1, (in_feat, hid_feat), dtype=jnp.float32) * 0.05
    b1 = jax.random.normal(kb1, (hid_feat,), dtype=jnp.float32) * 0.01
    w2 = jax.random.normal(kw2, (hid_feat, out_feat), dtype=jnp.float32) * 0.05
    b2 = jax.random.normal(kb2, (out_feat,), dtype=jnp.float32) * 0.01

    # One-time weight preparation (pad + bf16 cast hoisted out of the call path).
    w1_p, b1_p, w2_p, b2_p = prepare_mlp_params(w1, b1, w2, b2)

    out = jax.block_until_ready(
        mlp_pallas(x, w1_p, b1_p, w2_p, b2_p, out_feat=out_feat)
    )
    ref = mlp_reference(x, w1, b1, w2, b2)

    assert out.shape == (B, S, out_feat)
    # bf16 matmul operands (f32 accumulation) -> small deviation vs f32 reference.
    assert jnp.allclose(out, ref, atol=2e-2, rtol=2e-2), "mismatch vs reference"

    print("KERNEL_OK")
</pallas_src>

<mosaic_0001>
module attributes {stable_mosaic.version = 11 : i64} {
  func.func @_mlp_kernel(%arg0: i32, %arg1: memref<8x128xf32, #tpu.memory_space<vmem>>, %arg2: memref<128x128xbf16, #tpu.memory_space<vmem>>, %arg3: memref<1x128xf32, #tpu.memory_space<vmem>>, %arg4: memref<128x128xbf16, #tpu.memory_space<vmem>>, %arg5: memref<1x128xf32, #tpu.memory_space<vmem>>, %arg6: memref<8x128xf32, #tpu.memory_space<vmem>>) attributes {dimension_semantics = [#tpu.dimension_semantics<parallel>], iteration_bounds = array<i64: 2>, scalar_prefetch = 0 : i64, scratch_operands = 0 : i64, tpu.core_type = #tpu.core_type<tc>, window_params = [{transform_indices = @transform_0, window_bounds = array<i64: 8, 128>}, {pipeline_mode = #tpu.pipeline_mode<synchronous>, transform_indices = @transform_1, window_bounds = array<i64: 128, 128>}, {pipeline_mode = #tpu.pipeline_mode<synchronous>, transform_indices = @transform_2, window_bounds = array<i64: 1, 128>}, {pipeline_mode = #tpu.pipeline_mode<synchronous>, transform_indices = @transform_3, window_bounds = array<i64: 128, 128>}, {pipeline_mode = #tpu.pipeline_mode<synchronous>, transform_indices = @transform_4, window_bounds = array<i64: 1, 128>}, {transform_indices = @transform_5, window_bounds = array<i64: 8, 128>}]} {
    %c0 = arith.constant 0 : index
    %c0_0 = arith.constant 0 : index
    %0 = vector.load %arg1[%c0, %c0_0] : memref<8x128xf32, #tpu.memory_space<vmem>>, vector<8x128xf32>
    %1 = arith.truncf %0 : vector<8x128xf32> to vector<8x128xbf16>
    %c0_1 = arith.constant 0 : index
    %c0_2 = arith.constant 0 : index
    %2 = vector.load %arg2[%c0_1, %c0_2] : memref<128x128xbf16, #tpu.memory_space<vmem>>, vector<128x128xbf16>
    %cst = arith.constant dense<0.000000e+00> : vector<8x128xf32>
    %3 = tpu.matmul %1, %2, %cst {dimension_numbers = #tpu.dot_dimension_numbers<[1], [0], [0], [1], [0, 0, 1, 1], [], []>} : vector<8x128xbf16>, vector<128x128xbf16>, vector<8x128xf32> -> vector<8x128xf32>
    %c0_3 = arith.constant 0 : index
    %c0_4 = arith.constant 0 : index
    %4 = vector.load %arg3[%c0_3, %c0_4] : memref<1x128xf32, #tpu.memory_space<vmem>>, vector<1x128xf32>
    %5 = vector.broadcast %4 : vector<1x128xf32> to vector<8x128xf32>
    %6 = arith.addf %3, %5 : vector<8x128xf32>
    %cst_5 = arith.constant 5.000000e-01 : f32
    %7 = vector.broadcast %cst_5 : f32 to vector<8x128xf32>
    %8 = arith.mulf %7, %6 : vector<8x128xf32>
    %cst_6 = arith.constant 0.707106769 : f32
    %9 = vector.broadcast %cst_6 : f32 to vector<8x128xf32>
    %10 = arith.mulf %6, %9 : vector<8x128xf32>
    %11 = math.erf %10 : vector<8x128xf32>
    %cst_7 = arith.constant 1.000000e+00 : f32
    %12 = vector.broadcast %cst_7 : f32 to vector<8x128xf32>
    %13 = arith.addf %12, %11 : vector<8x128xf32>
    %14 = arith.mulf %8, %13 : vector<8x128xf32>
    %15 = arith.truncf %14 : vector<8x128xf32> to vector<8x128xbf16>
    %c0_8 = arith.constant 0 : index
    %c0_9 = arith.constant 0 : index
    %16 = vector.load %arg4[%c0_8, %c0_9] : memref<128x128xbf16, #tpu.memory_space<vmem>>, vector<128x128xbf16>
    %cst_10 = arith.constant dense<0.000000e+00> : vector<8x128xf32>
    %17 = tpu.matmul %15, %16, %cst_10 {dimension_numbers = #tpu.dot_dimension_numbers<[1], [0], [0], [1], [0, 0, 1, 1], [], []>} : vector<8x128xbf16>, vector<128x128xbf16>, vector<8x128xf32> -> vector<8x128xf32>
    %c0_11 = arith.constant 0 : index
    %c0_12 = arith.constant 0 : index
    %18 = vector.load %arg5[%c0_11, %c0_12] : memref<1x128xf32, #tpu.memory_space<vmem>>, vector<1x128xf32>
    %19 = vector.broadcast %18 : vector<1x128xf32> to vector<8x128xf32>
    %20 = arith.addf %17, %19 : vector<8x128xf32>
    %c0_13 = arith.constant 0 : index
    %c0_14 = arith.constant 0 : index
    %21 = vector.load %arg6[%c0_13, %c0_14] : memref<8x128xf32, #tpu.memory_space<vmem>>, vector<8x128xf32>
    tpu.vector_store %arg6[%c0_13, %c0_14], %20 {strides = array<i32>} : memref<8x128xf32, #tpu.memory_space<vmem>>, vector<8x128xf32>,
    return
  }
  func.func @transform_0(%arg0: i32) -> (i32, i32) {
    %c0_i32 = arith.constant 0 : i32
    %c0_i32_0 = arith.constant 0 : i32
    return %arg0, %c0_i32 : i32, i32
  }
  func.func @transform_1(%arg0: i32) -> (i32, i32) {
    %c0_i32 = arith.constant 0 : i32
    %c0_i32_0 = arith.constant 0 : i32
    %c0_i32_1 = arith.constant 0 : i32
    return %c0_i32, %c0_i32_0 : i32, i32
  }
  func.func @transform_2(%arg0: i32) -> (i32, i32) {
    %c0_i32 = arith.constant 0 : i32
    %c0_i32_0 = arith.constant 0 : i32
    %c0_i32_1 = arith.constant 0 : i32
    return %c0_i32, %c0_i32_0 : i32, i32
  }
  func.func @transform_3(%arg0: i32) -> (i32, i32) {
    %c0_i32 = arith.constant 0 : i32
    %c0_i32_0 = arith.constant 0 : i32
    %c0_i32_1 = arith.constant 0 : i32
    return %c0_i32, %c0_i32_0 : i32, i32
  }
  func.func @transform_4(%arg0: i32) -> (i32, i32) {
    %c0_i32 = arith.constant 0 : i32
    %c0_i32_0 = arith.constant 0 : i32
    %c0_i32_1 = arith.constant 0 : i32
    return %c0_i32, %c0_i32_0 : i32, i32
  }
  func.func @transform_5(%arg0: i32) -> (i32, i32) {
    %c0_i32 = arith.constant 0 : i32
    %c0_i32_0 = arith.constant 0 : i32
    return %arg0, %c0_i32 : i32, i32
  }
}

</mosaic_0001>

<llo_original>
// kernel: mlp_pallas.1
$region0: #{mlp_pallas.1}
  #allocation0 [shape = 'u32[]', space=smem, size = 0x4, offset = 0x4, fixed_abs, tag = 'smem constant byte address 0x4 - core index']
  #allocation1 [shape = 'u32[144,128]{1,0:T(1,128)}', space=vmem, size = 0x12000, scoped, tag = 'internal scratch']
  %s0 = inlined_call_operand.vmem [shape: f32[16,128], index: 0, kind: input, shape index: {}]
  %s1 = inlined_call_operand.hbm [shape: bf16[128,128], index: 1, kind: input, shape index: {}]
  %s2 = inlined_call_operand.vmem [shape: f32[1,128], index: 2, kind: input, shape index: {}]
  %s3 = inlined_call_operand.hbm [shape: bf16[128,128], index: 3, kind: input, shape index: {}]
  %s4 = inlined_call_operand.vmem [shape: f32[1,128], index: 4, kind: input, shape index: {}]
  %s5 = inlined_call_operand.vmem [shape: f32[16,128], index: 5, kind: output, shape index: {}]
  %s6 = sld [smem:[#allocation0]]
  $region61: #{mlp_pallas.1} parent=0
    _
  %s8 = ssub.s32 1, %s6
  %s9 = scalar_select 0, %s8, %s6
  $region1: #{mlp_pallas.1} parent=0
    #allocation2 [shape = 'u8[32768]{0}', space=vmem, size = 0x8000, scoped, tag = 'input window, operand 1, single buffered']
    #allocation3 [shape = 's32[2]{0}', space=sflag, size = 0x8, scoped, tag = 'scoped memory for mlp_pallas.1']
    #allocation4 [shape = 'u8[32768]{0}', space=vmem, size = 0x8000, scoped, tag = 'input window, operand 3, single buffered']
    #allocation5 [shape = 's32[1]{0}', space=sflag, size = 0x4, scoped, tag = 'scoped memory for mlp_pallas.1']
    %10 = vsyncpa [#allocation3], 0
    %11 = vsyncpa [#allocation5], 0
    loop: start=0, step=1, limit=4
    $region2: #{mlp_pallas.1} parent=1 // loop_pre_header
      _
    $region3: #{mlp_pallas.1} parent=1 // loop_header
      %s13 = sphi 0, %s17
      %p14 = scmp.ge.s32.totalorder %s13, 4
      %s23 = sphi 0, %s25
      %s26 = sphi 0, %s23
      %s27 = sphi 0, %s26
      %s43 = sphi 0, %s27
      %s47 = sphi 0, %s47
      %s49 = sphi 0, %s47
      %s50 = sphi 0, %s49
      %s64 = sphi 0, %s50
      %s68 = sphi 0, %s68
      %s70 = sphi 0, %s68
      %s71 = sphi 0, %s70
      %s85 = sphi 0, %s71
      %s89 = sphi 0, %s89
      %s91 = sphi 0, %s89
      %s92 = sphi 0, %s91
      %s106 = sphi 0, %s92
      %s110 = sphi 0, %s110
      %s112 = sphi 0, %s110
      %s113 = sphi 0, %s112
      %s127 = sphi 0, %s113
      %s133 = sphi 0, %s135
      %s136 = sphi 0, %s133
      %s137 = sphi 0, %s136
      %s153 = sphi 0, %s137
    $region4: #{mlp_pallas.1} parent=1 // loop_header_branch
      %16 = sbr.rel (%p14) target = $region8
    $region5: #{mlp_pallas.1} parent=1 // loop_body
      %s18 = ssub.s32 %s13, 1
      %s19 = ssub.s32 %s13, 2
      %s20 = sadd.s32 %s13, 1
      %s21 = ssub.s32 %s13, %s20
      %p22 = scmp.eq.s32.totalorder %s21, 0
      %s24 = sadd.s32 %s23, 1
      %s25 = scalar_select %p22, %s23, %s24
      %p28 = pneg %p22
      %p29 = scmp.eq.s32.totalorder %s13, 1
      %p30 = por %p28, %p29
      %p31 = scmp.ne.s32.totalorder %s23, %s26
      %p32 = scmp.eq.s32.totalorder %s13, 0
      %p33 = por %p31, %p32
      %p34 = scmp.ne.s32.totalorder %s23, %s26
      %p35 = scmp.eq.s32.totalorder %s18, 1
      %p36 = por %p34, %p35
      %p37 = scmp.ne.s32.totalorder %s26, %s27
      %p38 = scmp.eq.s32.totalorder %s18, 0
      %p39 = por %p37, %p38
      %p40 = scmp.ne.s32.totalorder %s26, %s27
      %p41 = scmp.eq.s32.totalorder %s19, 1
      %p42 = por %p40, %p41
      %p44 = scmp.ne.s32.totalorder %s27, %s43
      %p45 = scmp.eq.s32.totalorder %s19, 0
      %p46 = por %p44, %p45
      %s48 = sadd.s32 %s47, 1
      %p51 = scmp.eq.s32.totalorder %s13, 1
      %p52 = scmp.ne.s32.totalorder %s47, %s49
      %p53 = scmp.eq.s32.totalorder %s13, 0
      %p54 = por %p52, %p53
      %p55 = scmp.ne.s32.totalorder %s47, %s49
      %p56 = scmp.eq.s32.totalorder %s18, 1
      %p57 = por %p55, %p56
      %p58 = scmp.ne.s32.totalorder %s49, %s50
      %p59 = scmp.eq.s32.totalorder %s18, 0
      %p60 = por %p58, %p59
      %p61 = scmp.ne.s32.totalorder %s49, %s50
      %p62 = scmp.eq.s32.totalorder %s19, 1
      %p63 = por %p61, %p62
      %p65 = scmp.ne.s32.totalorder %s50, %s64
      %p66 = scmp.eq.s32.totalorder %s19, 0
      %p67 = por %p65, %p66
      %s69 = sadd.s32 %s68, 1
      %p72 = scmp.eq.s32.totalorder %s13, 1
      %p73 = scmp.ne.s32.totalorder %s68, %s70
      %p74 = scmp.eq.s32.totalorder %s13, 0
      %p75 = por %p73, %p74
      %p76 = scmp.ne.s32.totalorder %s68, %s70
      %p77 = scmp.eq.s32.totalorder %s18, 1
      %p78 = por %p76, %p77
      %p79 = scmp.ne.s32.totalorder %s70, %s71
      %p80 = scmp.eq.s32.totalorder %s18, 0
      %p81 = por %p79, %p80
      %p82 = scmp.ne.s32.totalorder %s70, %s71
      %p83 = scmp.eq.s32.totalorder %s19, 1
      %p84 = por %p82, %p83
      %p86 = scmp.ne.s32.totalorder %s71, %s85
      %p87 = scmp.eq.s32.totalorder %s19, 0
      %p88 = por %p86, %p87
      %s90 = sadd.s32 %s89, 1
      %p93 = scmp.eq.s32.totalorder %s13, 1
      %p94 = scmp.ne.s32.totalorder %s89, %s91
      %p95 = scmp.eq.s32.totalorder %s13, 0
      %p96 = por %p94, %p95
      %p97 = scmp.ne.s32.totalorder %s89, %s91
      %p98 = scmp.eq.s32.totalorder %s18, 1
      %p99 = por %p97, %p98
      %p100 = scmp.ne.s32.totalorder %s91, %s92
      %p101 = scmp.eq.s32.totalorder %s18, 0
      %p102 = por %p100, %p101
      %p103 = scmp.ne.s32.totalorder %s91, %s92
      %p104 = scmp.eq.s32.totalorder %s19, 1
      %p105 = por %p103, %p104
      %p107 = scmp.ne.s32.totalorder %s92, %s106
      %p108 = scmp.eq.s32.totalorder %s19, 0
      %p109 = por %p107, %p108
      %s111 = sadd.s32 %s110, 1
      %p114 = scmp.eq.s32.totalorder %s13, 1
      %p115 = scmp.ne.s32.totalorder %s110, %s112
      %p116 = scmp.eq.s32.totalorder %s13, 0
      %p117 = por %p115, %p116
      %p118 = scmp.ne.s32.totalorder %s110, %s112
      %p119 = scmp.eq.s32.totalorder %s18, 1
      %p120 = por %p118, %p119
      %p121 = scmp.ne.s32.totalorder %s112, %s113
      %p122 = scmp.eq.s32.totalorder %s18, 0
      %p123 = por %p121, %p122
      %p124 = scmp.ne.s32.totalorder %s112, %s113
      %p125 = scmp.eq.s32.totalorder %s19, 1
      %p126 = por %p124, %p125
      %p128 = scmp.ne.s32.totalorder %s113, %s127
      %p129 = scmp.eq.s32.totalorder %s19, 0
      %p130 = por %p128, %p129
      %s131 = ssub.s32 %s13, %s20
      %p132 = scmp.eq.s32.totalorder %s131, 0
      %s134 = sadd.s32 %s133, 1
      %s135 = scalar_select %p132, %s133, %s134
      %p138 = pneg %p132
      %p139 = scmp.eq.s32.totalorder %s13, 1
      %p140 = por %p138, %p139
      %p141 = scmp.ne.s32.totalorder %s133, %s136
      %p142 = scmp.eq.s32.totalorder %s13, 0
      %p143 = por %p141, %p142
      %p144 = scmp.ne.s32.totalorder %s133, %s136
      %p145 = scmp.eq.s32.totalorder %s18, 1
      %p146 = por %p144, %p145
      %p147 = scmp.ne.s32.totalorder %s136, %s137
      %p148 = scmp.eq.s32.totalorder %s18, 0
      %p149 = por %p147, %p148
      %p150 = scmp.ne.s32.totalorder %s136, %s137
      %p151 = scmp.eq.s32.totalorder %s19, 1
      %p152 = por %p150, %p151
      %p154 = scmp.ne.s32.totalorder %s137, %s153
      %p155 = scmp.eq.s32.totalorder %s19, 0
      %p156 = por %p154, %p155
      %p157 = scmp.le.s32.totalorder 1, %s13
      %p158 = scmp.lt.s32.totalorder %s13, 3
      %p159 = pnand %p157, %p158
      %p160 = pneg %p159
      // Predicated region
      $region9: #{mlp_pallas.1} parent=5 // pred_check
        _
      $region10: #{mlp_pallas.1} parent=5 // pred_check_branch
        %162 = sbr.rel (%p159) target = $region12
      $region11: #{mlp_pallas.1} parent=5 // pred_region
        %s163 = ssub.s32 %s13, 1
        // Predicated region
        $region13: #{mlp_pallas.1} parent=11 // pred_check
          %p164 = pneg %p60
        $region14: #{mlp_pallas.1} parent=11 // pred_check_branch
          %166 = sbr.rel (%p164) target = $region16
        $region15: #{mlp_pallas.1} parent=11 // pred_region
          %s168 = ssub.s32 1024, 1024
          %169 = vsyncadd [#allocation3], %s168
          %s170 = sshll.u32 [#allocation2], 4
          %s171 = int_to_ptr.vmem [resolvable:$true] %s170
          %176 = dma.hbm_to_vmem [thread:$0]  %s1, 1024, %s171, [#allocation3], 64, 64, 4
        $region16: #{mlp_pallas.1} parent=11 // pred_fallthru
          _
        // Predicated region
        $region17: #{mlp_pallas.1} parent=11 // pred_check
          %p177 = pneg %p81
        $region18: #{mlp_pallas.1} parent=11 // pred_check_branch
          %179 = sbr.rel (%p177) target = $region20
        $region19: #{mlp_pallas.1} parent=11 // pred_region
          _
        $region20: #{mlp_pallas.1} parent=11 // pred_fallthru
          _
        // Predicated region
        $region21: #{mlp_pallas.1} parent=11 // pred_check
          %p180 = pneg %p102
        $region22: #{mlp_pallas.1} parent=11 // pred_check_branch
          %182 = sbr.rel (%p180) target = $region24
        $region23: #{mlp_pallas.1} parent=11 // pred_region
          %s184 = ssub.s32 1024, 1024
          %185 = vsyncadd [#allocation5], %s184
          %s186 = sshll.u32 [#allocation4], 4
          %s187 = int_to_ptr.vmem [resolvable:$true] %s186
          %192 = dma.hbm_to_vmem [thread:$0]  %s3, 1024, %s187, [#allocation5], 64, 64, 4
        $region24: #{mlp_pallas.1} parent=11 // pred_fallthru
          _
        // Predicated region
        $region25: #{mlp_pallas.1} parent=11 // pred_check
          %p193 = pneg %p123
        $region26: #{mlp_pallas.1} parent=11 // pred_check_branch
          %195 = sbr.rel (%p193) target = $region28
        $region27: #{mlp_pallas.1} parent=11 // pred_region
          _
        $region28: #{mlp_pallas.1} parent=11 // pred_fallthru
          _
      $region12: #{mlp_pallas.1} parent=5 // pred_fallthru
        _
      %p196 = scmp.lt.s32.totalorder %s13, 2
      // Predicated region
      $region29: #{mlp_pallas.1} parent=5 // pred_check
        %p197 = pneg %p196
      $region30: #{mlp_pallas.1} parent=5 // pred_check_branch
        %199 = sbr.rel (%p197) target = $region32
      $region31: #{mlp_pallas.1} parent=5 // pred_region
        // Predicated region
        $region33: #{mlp_pallas.1} parent=31 // pred_check
          %p200 = pneg %p33
        $region34: #{mlp_pallas.1} parent=31 // pred_check_branch
          %202 = sbr.rel (%p200) target = $region36
        $region35: #{mlp_pallas.1} parent=31 // pred_region
          %p203 = scmp.lt.s32.totalorder %s13, 1
          %s204 = scalar_select %p203, %s13, 1
          %s205 = smul.addr %s204, 8
          %s206 = scalar_lea.vmem %s0, %s205
        $region36: #{mlp_pallas.1} parent=31 // pred_fallthru
          _
      $region32: #{mlp_pallas.1} parent=5 // pred_fallthru
        _
      %p207 = scmp.le.s32.totalorder 1, %s13
      %p208 = scmp.lt.s32.totalorder %s13, 3
      %p209 = pnand %p207, %p208
      %p210 = pneg %p209
      // Predicated region
      $region37: #{mlp_pallas.1} parent=5 // pred_check
        _
      $region38: #{mlp_pallas.1} parent=5 // pred_check_branch
        %212 = sbr.rel (%p209) target = $region40
      $region39: #{mlp_pallas.1} parent=5 // pred_region
        %s213 = ssub.s32 %s13, 1
        // Predicated region
        $region41: #{mlp_pallas.1} parent=39 // pred_check
          %p214 = pneg %p60
        $region42: #{mlp_pallas.1} parent=39 // pred_check_branch
          %216 = sbr.rel (%p214) target = $region44
        $region43: #{mlp_pallas.1} parent=39 // pred_region
          %217 = dma.done [#allocation3], 1024
        $region44: #{mlp_pallas.1} parent=39 // pred_fallthru
          _
        // Predicated region
        $region45: #{mlp_pallas.1} parent=39 // pred_check
          %p218 = pneg %p102
        $region46: #{mlp_pallas.1} parent=39 // pred_check_branch
          %220 = sbr.rel (%p218) target = $region48
        $region47: #{mlp_pallas.1} parent=39 // pred_region
          %221 = dma.done [#allocation5], 1024
        $region48: #{mlp_pallas.1} parent=39 // pred_fallthru
          _
        %p222 = scmp.lt.s32.totalorder %s18, 1
        %s223 = scalar_select %p222, %s18, 1
        %s224 = smul.addr %s223, 8
        %s225 = scalar_lea.vmem %s0, %s224
        %p226 = pneg %p39
        %p227 = pneg %p36
        %p228 = pneg %p60
        %p229 = pneg %p57
        %p230 = pneg %p81
        %p231 = pneg %p78
        %p232 = pneg %p102
        %p233 = pneg %p99
        %p234 = pneg %p123
        %p235 = pneg %p120
        %p236 = pneg %p149
        %p237 = pneg %p146
        %p238 = scmp.lt.s32.totalorder %s18, 1
        %s239 = scalar_select %p238, %s18, 1
        %s240 = smul.addr %s239, 8
        %s241 = scalar_lea.vmem %s5, %s240
        %p242 = scmp.lt.s32.totalorder %s18, 1
        %s243 = scalar_select %p242, %s18, 1
        %s244 = smul.addr %s243, 8
        %s245 = scalar_lea.vmem %s0, %s244
        %p246 = scmp.lt.s32.totalorder %s18, 1
        %s247 = scalar_select %p246, %s18, 1
        %s248 = smul.addr %s247, 8
        %s249 = scalar_lea.vmem %s5, %s248
        %v251 = vld [vmem:[%s245] sm:$0xff]
        %v252 = vpack.c.bf16 %v251, %v251
        %v253 = vld [vmem:[#allocation2] sm:$0xf]
        %v254 = vld [vmem:[#allocation2 + $0x4] sm:$0xf]
        %v255 = vld [vmem:[#allocation2 + $0x8] sm:$0xf]
        %v256 = vld [vmem:[#allocation2 + $0xc] sm:$0xf]
        %v257 = vld [vmem:[#allocation2 + $0x10] sm:$0xf]
        %v258 = vld [vmem:[#allocation2 + $0x14] sm:$0xf]
        %v259 = vld [vmem:[#allocation2 + $0x18] sm:$0xf]
        %v260 = vld [vmem:[#allocation2 + $0x1c] sm:$0xf]
        %v261 = vld [vmem:[#allocation2 + $0x20] sm:$0xf]
        %v262 = vld [vmem:[#allocation2 + $0x24] sm:$0xf]
        %v263 = vld [vmem:[#allocation2 + $0x28] sm:$0xf]
        %v264 = vld [vmem:[#allocation2 + $0x2c] sm:$0xf]
        %v265 = vld [vmem:[#allocation2 + $0x30] sm:$0xf]
        %v266 = vld [vmem:[#allocation2 + $0x34] sm:$0xf]
        %v267 = vld [vmem:[#allocation2 + $0x38] sm:$0xf]
        %v268 = vld [vmem:[#allocation2 + $0x3c] sm:$0xf]
        %v269 = vld [vmem:[%s2] sm:$0x1]
        %v271 = vlaneseq
        %v272 = vshrl.u32 %v271, 7
        %v273 = vsub.s32 0, %v272
        %v274 = vrot.slane %v269, %v273
        %v292 = vunpack.c.l.b16 %v253
        %v293 = vunpack.c.l.b16 %v254
        %v294 = vunpack.c.l.b16 %v255
        %v295 = vunpack.c.l.b16 %v256
        %v296 = vunpack.c.l.b16 %v257
        %v297 = vunpack.c.l.b16 %v258
        %v298 = vunpack.c.l.b16 %v259
        %v299 = vunpack.c.l.b16 %v260
        %v300 = vunpack.c.l.b16 %v261
        %v301 = vunpack.c.l.b16 %v262
        %v302 = vunpack.c.l.b16 %v263
        %v303 = vunpack.c.l.b16 %v264
        %v304 = vunpack.c.l.b16 %v265
        %v305 = vunpack.c.l.b16 %v266
        %v306 = vunpack.c.l.b16 %v267
        %v307 = vunpack.c.l.b16 %v268
        %v308 = vpack.c.b16 %v293, %v292
        %v309 = vpack.c.b16 %v295, %v294
        %v310 = vpack.c.b16 %v297, %v296
        %v311 = vpack.c.b16 %v299, %v298
        %v312 = vpack.c.b16 %v301, %v300
        %v313 = vpack.c.b16 %v303, %v302
        %v314 = vpack.c.b16 %v305, %v304
        %v315 = vpack.c.b16 %v307, %v306
        %324 = vmatprep.subr.bf16.mxu0 0
        %325 = vmatpush1.bf16.msra.mxu0 %v308
        %326 = vmatprep.subr.bf16.mxu0 0
        %327 = vmatpush1.bf16.msra.mxu0 %v309
        %328 = vmatprep.subr.bf16.mxu0 0
        %329 = vmatpush1.bf16.msra.mxu0 %v310
        %330 = vmatprep.subr.bf16.mxu0 0
        %331 = vmatpush1.bf16.msra.mxu0 %v311
        %332 = vmatprep.subr.bf16.mxu0 0
        %333 = vmatpush1.bf16.msra.mxu0 %v312
        %334 = vmatprep.subr.bf16.mxu0 0
        %335 = vmatpush1.bf16.msra.mxu0 %v313
        %336 = vmatprep.subr.bf16.mxu0 0
        %337 = vmatpush1.bf16.msra.mxu0 %v314
        %338 = vmatprep.subr.bf16.mxu0 0
        %339 = vmatpush1.bf16.msra.mxu0 %v315
        %340 = vmatprep.subr.bf16.mxu0 0
        %341 = vmatpush1.bf16.msra.mxu0 0
        %342 = vmatprep.subr.bf16.mxu0 0
        %343 = vmatpush1.bf16.msra.mxu0 0
        %344 = vmatprep.subr.bf16.mxu0 0
        %345 = vmatpush1.bf16.msra.mxu0 0
        %346 = vmatprep.subr.bf16.mxu0 0
        %347 = vmatpush1.bf16.msra.mxu0 0
        %348 = vmatprep.subr.bf16.mxu0 0
        %349 = vmatpush1.bf16.msra.mxu0 0
        %350 = vmatprep.subr.bf16.mxu0 0
        %351 = vmatpush1.bf16.msra.mxu0 0
        %352 = vmatprep.subr.bf16.mxu0 0
        %353 = vmatpush1.bf16.msra.mxu0 0
        %354 = vmatprep.subr.bf16.mxu0 0
        %355 = vmatpush1.bf16.msra.mxu0 0
        %356 = vmatprep.mubr.bf16.mxu0 0
        %357 = vmatmul.mubr.bf16.gmra.mrb[0].mxu0 %v252
        %v358 = vpop.f32.mrb[0].mxu0
        %v359 = vadd.f32 %v274, %v358
        %v360 = vpop.f32.mrb[0].mxu0
        %v361 = vpop.f32.mrb[0].mxu0
        %v362 = vpop.f32.mrb[0].mxu0
        %363 = vdwg.mxu0
        %v364 = vmul.f32 %v359, 0.5
        %v365 = vmul.f32 %v359, 0.70710677
        %v366 = verf.f32.pop %v365
        %v367 = vadd.f32 %v366, 1.0
        %v368 = vmul.f32 %v364, %v367
        %v369 = vpack.c.bf16 %v368, %v368
        %v370 = vld [vmem:[#allocation4] sm:$0xf]
        %v371 = vld [vmem:[#allocation4 + $0x4] sm:$0xf]
        %v372 = vld [vmem:[#allocation4 + $0x8] sm:$0xf]
        %v373 = vld [vmem:[#allocation4 + $0xc] sm:$0xf]
        %v374 = vld [vmem:[#allocation4 + $0x10] sm:$0xf]
        %v375 = vld [vmem:[#allocation4 + $0x14] sm:$0xf]
        %v376 = vld [vmem:[#allocation4 + $0x18] sm:$0xf]
        %v377 = vld [vmem:[#allocation4 + $0x1c] sm:$0xf]
        %v378 = vld [vmem:[#allocation4 + $0x20] sm:$0xf]
        %v379 = vld [vmem:[#allocation4 + $0x24] sm:$0xf]
        %v380 = vld [vmem:[#allocation4 + $0x28] sm:$0xf]
        %v381 = vld [vmem:[#allocation4 + $0x2c] sm:$0xf]
        %v382 = vld [vmem:[#allocation4 + $0x30] sm:$0xf]
        %v383 = vld [vmem:[#allocation4 + $0x34] sm:$0xf]
        %v384 = vld [vmem:[#allocation4 + $0x38] sm:$0xf]
        %v385 = vld [vmem:[#allocation4 + $0x3c] sm:$0xf]
        %v386 = vld [vmem:[%s4] sm:$0x1]
        %v388 = vlaneseq
        %v389 = vshrl.u32 %v388, 7
        %v390 = vsub.s32 0, %v389
        %v391 = vrot.slane %v386, %v390
        %v409 = vunpack.c.l.b16 %v370
        %v410 = vunpack.c.l.b16 %v371
        %v411 = vunpack.c.l.b16 %v372
        %v412 = vunpack.c.l.b16 %v373
        %v413 = vunpack.c.l.b16 %v374
        %v414 = vunpack.c.l.b16 %v375
        %v415 = vunpack.c.l.b16 %v376
        %v416 = vunpack.c.l.b16 %v377
        %v417 = vunpack.c.l.b16 %v378
        %v418 = vunpack.c.l.b16 %v379
        %v419 = vunpack.c.l.b16 %v380
        %v420 = vunpack.c.l.b16 %v381
        %v421 = vunpack.c.l.b16 %v382
        %v422 = vunpack.c.l.b16 %v383
        %v423 = vunpack.c.l.b16 %v384
        %v424 = vunpack.c.l.b16 %v385
        %v425 = vpack.c.b16 %v410, %v409
        %v426 = vpack.c.b16 %v412, %v411
        %v427 = vpack.c.b16 %v414, %v413
        %v428 = vpack.c.b16 %v416, %v415
        %v429 = vpack.c.b16 %v418, %v417
        %v430 = vpack.c.b16 %v420, %v419
        %v431 = vpack.c.b16 %v422, %v421
        %v432 = vpack.c.b16 %v424, %v423
        %441 = vmatprep.subr.bf16.mxu0 0
        %442 = vmatpush1.bf16.msra.mxu0 %v425
        %443 = vmatprep.subr.bf16.mxu0 0
        %444 = vmatpush1.bf16.msra.mxu0 %v426
        %445 = vmatprep.subr.bf16.mxu0 0
        %446 = vmatpush1.bf16.msra.mxu0 %v427
        %447 = vmatprep.subr.bf16.mxu0 0
        %448 = vmatpush1.bf16.msra.mxu0 %v428
        %449 = vmatprep.subr.bf16.mxu0 0
        %450 = vmatpush1.bf16.msra.mxu0 %v429
        %451 = vmatprep.subr.bf16.mxu0 0
        %452 = vmatpush1.bf16.msra.mxu0 %v430
        %453 = vmatprep.subr.bf16.mxu0 0
        %454 = vmatpush1.bf16.msra.mxu0 %v431
        %455 = vmatprep.subr.bf16.mxu0 0
        %456 = vmatpush1.bf16.msra.mxu0 %v432
        %457 = vmatprep.subr.bf16.mxu0 0
        %458 = vmatpush1.bf16.msra.mxu0 0
        %459 = vmatprep.subr.bf16.mxu0 0
        %460 = vmatpush1.bf16.msra.mxu0 0
        %461 = vmatprep.subr.bf16.mxu0 0
        %462 = vmatpush1.bf16.msra.mxu0 0
        %463 = vmatprep.subr.bf16.mxu0 0
        %464 = vmatpush1.bf16.msra.mxu0 0
        %465 = vmatprep.subr.bf16.mxu0 0
        %466 = vmatpush1.bf16.msra.mxu0 0
        %467 = vmatprep.subr.bf16.mxu0 0
        %468 = vmatpush1.bf16.msra.mxu0 0
        %469 = vmatprep.subr.bf16.mxu0 0
        %470 = vmatpush1.bf16.msra.mxu0 0
        %471 = vmatprep.subr.bf16.mxu0 0
        %472 = vmatpush1.bf16.msra.mxu0 0
        %473 = vmatprep.mubr.bf16.mxu0 0
        %474 = vmatmul.mubr.bf16.gmra.mrb[0].mxu0 %v369
        %v475 = vpop.f32.mrb[0].mxu0
        %v476 = vadd.f32 %v391, %v475
        %v477 = vpop.f32.mrb[0].mxu0
        %v478 = vpop.f32.mrb[0].mxu0
        %v479 = vpop.f32.mrb[0].mxu0
        %480 = vdwg.mxu0
        %481 = vst [vmem:[%s249] sm:$0xff] %v476
        %p482 = scmp.lt.s32.totalorder %s18, 1
        %s483 = scalar_select %p482, %s18, 1
        %s484 = smul.addr %s483, 8
        %s485 = scalar_lea.vmem %s5, %s484
        // Predicated region
        $region49: #{mlp_pallas.1} parent=39 // pred_check
          %p486 = pneg %p146
        $region50: #{mlp_pallas.1} parent=39 // pred_check_branch
          %488 = sbr.rel (%p486) target = $region52
        $region51: #{mlp_pallas.1} parent=39 // pred_region
          _
        $region52: #{mlp_pallas.1} parent=39 // pred_fallthru
          _
      $region40: #{mlp_pallas.1} parent=5 // pred_fallthru
        _
      %p489 = scmp.le.s32.totalorder 2, %s13
      // Predicated region
      $region53: #{mlp_pallas.1} parent=5 // pred_check
        %p490 = pneg %p489
      $region54: #{mlp_pallas.1} parent=5 // pred_check_branch
        %492 = sbr.rel (%p490) target = $region56
      $region55: #{mlp_pallas.1} parent=5 // pred_region
        %s493 = ssub.s32 %s13, 2
        // Predicated region
        $region57: #{mlp_pallas.1} parent=55 // pred_check
          %p494 = pneg %p152
        $region58: #{mlp_pallas.1} parent=55 // pred_check_branch
          %496 = sbr.rel (%p494) target = $region60
        $region59: #{mlp_pallas.1} parent=55 // pred_region
          %p497 = scmp.lt.s32.totalorder %s19, 1
          %s498 = scalar_select %p497, %s19, 1
          %s499 = smul.addr %s498, 8
          %s500 = scalar_lea.vmem %s5, %s499
        $region60: #{mlp_pallas.1} parent=55 // pred_fallthru
          _
      $region56: #{mlp_pallas.1} parent=5 // pred_fallthru
        _
    $region6: #{mlp_pallas.1} parent=1 // loop_footer
      %s17 = sadd.s32 1, %s13
    $region7: #{mlp_pallas.1} parent=1 // loop_footer_branch
      %12 = sbr.rel target = $region3
    $region8: #{mlp_pallas.1} parent=1 // loop_exit
      _
    %501 = vsyncpa [#allocation3], 1
    %s502 = scalar_lea.sflag [#allocation3], 1
    %503 = vsyncpa %s502, 1
    %504 = vsyncpa [#allocation5], 1

</llo_original>
